<compile_context>
chip_gen: v7x
topology: tpu7x:2x2x1
jax: 0.10.0
libtpu: 0.0.40
codegen_flags: <defaults>
</compile_context>

<pallas_src>
import jax
import jax.numpy as jnp
from jax.experimental import pallas as pl
from jax.experimental.pallas import tpu as pltpu


def _vmem_limit_bytes():
    """~96 MiB on 128-MiB-VMEM chips (v5e/v6e), ~48 MiB on v7x (64 MiB physical)."""
    cap = 64 * 1024 * 1024
    try:
        info = pltpu.get_tpu_info()
        cap = int(getattr(info, "vmem_capacity_bytes", cap))
    except Exception:
        pass
    return int(min(96 * 1024 * 1024, cap * 3 // 4))


def _row_tile(rows, cols, bytes_per_elem=4, budget=8 << 20):
    """Row tile for the BN-affine kernel: big enough to amortize the ~0.35us per-step
    overhead, capped so (in + out) blocks stay within a modest VMEM budget."""
    if rows <= 16:
        return int(rows)
    t = min(rows, 2048, max(16, budget // (2 * cols * bytes_per_elem)))
    t = max(16, (t // 16) * 16)        # 16: bf16 second-minor tiling when block < full dim
    return int(min(t, rows))


def convbn3d_forward(x_ncdhw, weight, gamma=None, beta=None, *, pad=1, eps=1e-5):
    """ConvBn3D forward: Conv3d(k, stride=1, padding=pad, bias=False) + BatchNorm3d
    (training-mode batch statistics, affine gamma/beta, eps).

    x_ncdhw: (N, Cin, D, H, W) float32 (PyTorch NCDHW)
    weight:  (Cout, Cin, K, K, K) float32 (PyTorch Conv3d layout)
    returns: (N, Cout, DO, HO, WO) float32
    """
    N, CIN, D, H, W = x_ncdhw.shape
    COUT, CIN_w, K = weight.shape[0], weight.shape[1], weight.shape[2]
    assert CIN_w == CIN and weight.shape[2] == weight.shape[3] == weight.shape[4]
    # TODO(synk): stride > 1 is not implemented (module default stride=1).
    DO = D + 2 * pad - K + 1
    HO = H + 2 * pad - K + 1
    WO = W + 2 * pad - K + 1
    DP, HP, WP = D + 2 * pad, H + 2 * pad, W + 2 * pad

    MP = HO * WP                     # per-depth-slice output cols (incl. WP-WO garbage cols/row)
    extra_h = -(-(K - 1) // WP)      # extra zero rows so the last tap's flat window stays in-bounds
    LP = (HP + extra_h) * WP         # flat plane length (lane dim of the packed input)
    # Flat-row trick invariant: taps for garbage columns wrap across rows and the last
    # tap of the last row reads into the extra zero rows; both are excluded from the BN
    # statistics (colmask) and sliced off in the epilogue.  Do not change without care.
    assert LP >= HP * WP + K - 1
    KTC = K * K * K * CIN            # folded-depth contraction length
    KTC_PAD = ((KTC + 7) // 8) * 8

    # ---------------- glue: one axis swap + one pad (single extra HBM pass) ----------------
    # (N,CIN,D,H,W) -> (N, DP, CIN, LP) channel-planar flattened padded planes.
    # TODO(synk): fill the zero halo in a VMEM scratch inside the kernel to drop this pass.
    x_p = jnp.pad(jnp.transpose(x_ncdhw, (0, 2, 1, 3, 4)).astype(jnp.float32),
                  ((0, 0), (pad, pad), (0, 0), (pad, pad + extra_h), (pad, pad)))
    x_flat = x_p.reshape(N, DP, CIN, LP)

    # weight -> (COUT, KTC_PAD); column order = ((kd,kh,kw) tap)-major, then ci (zero pad cols).
    w_lhs = jnp.transpose(weight, (0, 2, 3, 4, 1)).reshape(COUT, KTC).astype(jnp.float32)
    w_lhs = jnp.pad(w_lhs, ((0, 0), (0, KTC_PAD - KTC)))

    # validity mask for the WP-WO garbage columns (excluded from BN statistics)
    colmask = (jnp.arange(MP, dtype=jnp.int32) % WP < WO).astype(jnp.float32).reshape(1, MP)

    vmem_limit = _vmem_limit_bytes()

    # ---- Pallas kernel 1: one deep MXU contraction per (n, od) + per-(n,od) BN partials ----
    def conv_stats_kernel(x_ref, w_ref, m_ref, y_ref, sum_ref, sq_ref, xcat_ref):
        od = pl.program_id(1)
        # zero the contraction-pad rows so 0 * (uninitialized VMEM) can't inject NaNs
        if KTC_PAD > KTC:
            xcat_ref[KTC:KTC_PAD, :] = jnp.zeros((KTC_PAD - KTC, MP), jnp.float32)
        # flat-row im2row: each (kd,kh,kw) tap of the flattened (CIN, LP) plane is a
        # contiguous lane slice starting at kh*WP+kw; stack taps along sublanes so the
        # whole conv for this output-depth slice is ONE (COUT,KTC)x(KTC,MP) dot.
        for kd in range(K):
            plane = x_ref[od + kd]                      # (CIN, LP), dynamic depth index
            for kh in range(K):
                for kw in range(K):
                    t = (kd * K + kh) * K + kw
                    s = kh * WP + kw
                    xcat_ref[t * CIN:(t + 1) * CIN, :] = plane[:, s:s + MP]
        y = jnp.dot(w_ref[...], xcat_ref[...],
                    preferred_element_type=jnp.float32)  # (COUT, MP), f32
        y_ref[...] = y.astype(y_ref.dtype)               # bf16 intermediate
        ym = y * m_ref[...]                              # mask garbage columns (stats only)
        sum_ref[...] = jnp.sum(ym, axis=1, keepdims=True)
        sq_ref[...] = jnp.sum(ym * y, axis=1, keepdims=True)

    y, psum, psq = pl.pallas_call(
        conv_stats_kernel,
        out_shape=(
            jax.ShapeDtypeStruct((N, DO, COUT, MP), jnp.bfloat16),
            jax.ShapeDtypeStruct((N, DO, COUT, 1), jnp.float32),
            jax.ShapeDtypeStruct((N, DO, COUT, 1), jnp.float32),
        ),
        grid_spec=pltpu.PrefetchScalarGridSpec(
            num_scalar_prefetch=0,
            grid=(N, DO),
            in_specs=[
                # whole per-sample slab; block index depends only on n -> DMA'd once per n
                pl.BlockSpec((pl.Squeezed(), DP, CIN, LP), lambda n, od: (n, 0, 0, 0)),
                # constant blocks: loaded once, no per-step re-DMA
                pl.BlockSpec((COUT, KTC_PAD), lambda n, od: (0, 0)),
                pl.BlockSpec((1, MP), lambda n, od: (0, 0)),
            ],
            out_specs=[
                pl.BlockSpec((pl.Squeezed(), pl.Squeezed(), COUT, MP),
                             lambda n, od: (n, od, 0, 0)),
                pl.BlockSpec((pl.Squeezed(), pl.Squeezed(), COUT, 1),
                             lambda n, od: (n, od, 0, 0)),
                pl.BlockSpec((pl.Squeezed(), pl.Squeezed(), COUT, 1),
                             lambda n, od: (n, od, 0, 0)),
            ],
            scratch_shapes=[pltpu.VMEM((KTC_PAD, MP), jnp.float32)],  # packed im2row taps
        ),
        compiler_params=pltpu.CompilerParams(
            dimension_semantics=("parallel", "parallel"),
            vmem_limit_bytes=vmem_limit),
    )(x_flat, w_lhs, colmask)

    # --------- BN statistics from the per-(n, od) partial reductions (f32) ---------
    # TODO(synk): E[x^2]-E[x]^2 can catastrophically cancel at very large N*D*H*W or
    # large means; use a shifted / Welford accumulation for production scales.
    count = float(N * DO * HO * WO)
    csum = jnp.sum(psum, axis=(0, 1)).reshape(COUT)
    csq = jnp.sum(psq, axis=(0, 1)).reshape(COUT)
    mean = csum / count
    var = csq / count - mean * mean            # biased variance, as BN training uses
    if gamma is None:
        gamma = jnp.ones((COUT,), jnp.float32)
    if beta is None:
        beta = jnp.zeros((COUT,), jnp.float32)
    inv = gamma.astype(jnp.float32) / jnp.sqrt(var + eps)
    scale = inv
    shift = beta.astype(jnp.float32) - mean * inv

    # ---- Pallas kernel 2: tiled, lane-dense BN affine over (N*DO, COUT*MP) ----
    rows = N * DO
    cols = COUT * MP
    y2 = y.reshape(rows, cols)
    scale_row = jnp.repeat(scale, MP).reshape(1, cols)   # col = co*MP + p -> scale[co]
    shift_row = jnp.repeat(shift, MP).reshape(1, cols)
    TR = _row_tile(rows, cols)

    def bn_kernel(y_ref, s_ref, b_ref, o_ref):
        o_ref[...] = y_ref[...].astype(jnp.float32) * s_ref[...] + b_ref[...]

    out2 = pl.pallas_call(
        bn_kernel,
        out_shape=jax.ShapeDtypeStruct((rows, cols), jnp.float32),
        grid_spec=pltpu.PrefetchScalarGridSpec(
            num_scalar_prefetch=0,
            grid=(pl.cdiv(rows, TR),),
            in_specs=[
                pl.BlockSpec((TR, cols), lambda r: (r, 0)),
                pl.BlockSpec((1, cols), lambda r: (0, 0)),
                pl.BlockSpec((1, cols), lambda r: (0, 0)),
            ],
            out_specs=pl.BlockSpec((TR, cols), lambda r: (r, 0)),
        ),
        compiler_params=pltpu.CompilerParams(
            dimension_semantics=("parallel",),
            vmem_limit_bytes=vmem_limit),
    )(y2, scale_row, shift_row)

    # drop the WP-WO garbage columns; channel transpose is just a 1<->2 axis swap now.
    # TODO(synk): fuse this slice into kernel 2's out_spec once WO on lanes is dense enough.
    out = out2.reshape(N, DO, COUT, HO, WP)[..., :WO]
    return jnp.transpose(out, (0, 2, 1, 3, 4))


def convbn3d_reference(x, w, *, pad=1, eps=1e-5):
    """Pure-JAX reference: Conv3d(pad, stride=1, bias=False) + BatchNorm3d(train)."""
    y = jax.lax.conv_general_dilated(
        x.astype(jnp.float32), w.astype(jnp.float32),
        window_strides=(1, 1, 1),
        padding=((pad, pad), (pad, pad), (pad, pad)),
        dimension_numbers=('NCDHW', 'OIDHW', 'NCDHW'))
    mean = y.mean(axis=(0, 2, 3, 4), keepdims=True)
    var = y.var(axis=(0, 2, 3, 4), keepdims=True)       # biased, like BN training
    return (y - mean) / jnp.sqrt(var + eps)


if __name__ == "__main__":
    key = jax.random.PRNGKey(0)
    kx, kw = jax.random.split(key)
    N, CIN, COUT, D, H, W, K = 2, 4, 8, 6, 6, 6, 3

    x = jax.random.normal(kx, (N, CIN, D, H, W), dtype=jnp.float32)
    # deterministic kaiming-uniform-style init for Conv3d weight (Cout,Cin,K,K,K)
    fan_in = CIN * K ** 3
    bound = (1.0 / fan_in) ** 0.5
    weight = jax.random.uniform(kw, (COUT, CIN, K, K, K),
                                minval=-bound, maxval=bound, dtype=jnp.float32)

    out = jax.block_until_ready(convbn3d_forward(x, weight))
    ref = jax.block_until_ready(convbn3d_reference(x, weight))

    assert out.shape == (N, COUT, D, H, W), out.shape
    max_err = float(jnp.max(jnp.abs(out - ref)))
    # tolerance accounts for the bf16 y intermediate (stats & affine math stay f32)
    assert jnp.allclose(out, ref, rtol=2e-2, atol=2e-2), max_err
    print("KERNEL_OK")
</pallas_src>

<mosaic_0001>
module attributes {stable_mosaic.version = 11 : i64} {
  func.func @conv_stats_kernel(%arg0: i32, %arg1: i32, %arg2: memref<1x8x4x72xf32, #tpu.memory_space<vmem>>, %arg3: memref<8x112xf32, #tpu.memory_space<vmem>>, %arg4: memref<1x48xf32, #tpu.memory_space<vmem>>, %arg5: memref<1x1x8x48xbf16, #tpu.memory_space<vmem>>, %arg6: memref<1x1x8x1xf32, #tpu.memory_space<vmem>>, %arg7: memref<1x1x8x1xf32, #tpu.memory_space<vmem>>, %arg8: memref<112x48xf32, #tpu.memory_space<vmem>>) attributes {dimension_semantics = [#tpu.dimension_semantics<parallel>, #tpu.dimension_semantics<parallel>], iteration_bounds = array<i64: 2, 6>, scalar_prefetch = 0 : i64, scratch_operands = 1 : i64, tpu.core_type = #tpu.core_type<tc>, window_params = [{transform_indices = @transform_0, window_bounds = array<i64: 1, 8, 4, 72>}, {pipeline_mode = #tpu.pipeline_mode<synchronous>, transform_indices = @transform_1, window_bounds = array<i64: 8, 112>}, {pipeline_mode = #tpu.pipeline_mode<synchronous>, transform_indices = @transform_2, window_bounds = array<i64: 1, 48>}, {transform_indices = @transform_3, window_bounds = array<i64: 1, 1, 8, 48>}, {transform_indices = @transform_4, window_bounds = array<i64: 1, 1, 8, 1>}, {transform_indices = @transform_5, window_bounds = array<i64: 1, 1, 8, 1>}]} {
    %cst = arith.constant 0.000000e+00 : f32
    %0 = vector.broadcast %cst : f32 to vector<4x48xf32>
    %c108 = arith.constant 108 : index
    %c0 = arith.constant 0 : index
    %1 = vector.load %arg8[%c108, %c0] : memref<112x48xf32, #tpu.memory_space<vmem>>, vector<4x48xf32>
    tpu.vector_store %arg8[%c108, %c0], %0 {strides = array<i32>} : memref<112x48xf32, #tpu.memory_space<vmem>>, vector<4x48xf32>,
    %c0_i32 = arith.constant 0 : i32
    %2 = arith.addi %arg1, %c0_i32 : i32
    %c0_0 = arith.constant 0 : index
    %3 = arith.index_cast %2 : i32 to index
    %c0_1 = arith.constant 0 : index
    %c0_2 = arith.constant 0 : index
    %4 = vector.load %arg2[%c0_0, %3, %c0_1, %c0_2] : memref<1x8x4x72xf32, #tpu.memory_space<vmem>>, vector<1x1x4x72xf32>
    %5 = vector.shape_cast %4 : vector<1x1x4x72xf32> to vector<4x72xf32>
    %6 = vector.extract_strided_slice %5 {offsets = [0, 0], sizes = [4, 48], strides = [1, 1]} : vector<4x72xf32> to vector<4x48xf32>
    %c0_3 = arith.constant 0 : index
    %c0_4 = arith.constant 0 : index
    %7 = vector.load %arg8[%c0_3, %c0_4] : memref<112x48xf32, #tpu.memory_space<vmem>>, vector<4x48xf32>
    tpu.vector_store %arg8[%c0_3, %c0_4], %6 {strides = array<i32>} : memref<112x48xf32, #tpu.memory_space<vmem>>, vector<4x48xf32>,
    %8 = vector.extract_strided_slice %5 {offsets = [0, 1], sizes = [4, 48], strides = [1, 1]} : vector<4x72xf32> to vector<4x48xf32>
    %c4 = arith.constant 4 : index
    %c0_5 = arith.constant 0 : index
    %9 = vector.load %arg8[%c4, %c0_5] : memref<112x48xf32, #tpu.memory_space<vmem>>, vector<4x48xf32>
    tpu.vector_store %arg8[%c4, %c0_5], %8 {strides = array<i32>} : memref<112x48xf32, #tpu.memory_space<vmem>>, vector<4x48xf32>,
    %10 = vector.extract_strided_slice %5 {offsets = [0, 2], sizes = [4, 48], strides = [1, 1]} : vector<4x72xf32> to vector<4x48xf32>
    %c8 = arith.constant 8 : index
    %c0_6 = arith.constant 0 : index
    %11 = vector.load %arg8[%c8, %c0_6] : memref<112x48xf32, #tpu.memory_space<vmem>>, vector<4x48xf32>
    tpu.vector_store %arg8[%c8, %c0_6], %10 {strides = array<i32>} : memref<112x48xf32, #tpu.memory_space<vmem>>, vector<4x48xf32>,
    %12 = vector.extract_strided_slice %5 {offsets = [0, 8], sizes = [4, 48], strides = [1, 1]} : vector<4x72xf32> to vector<4x48xf32>
    %c12 = arith.constant 12 : index
    %c0_7 = arith.constant 0 : index
    %13 = vector.load %arg8[%c12, %c0_7] : memref<112x48xf32, #tpu.memory_space<vmem>>, vector<4x48xf32>
    tpu.vector_store %arg8[%c12, %c0_7], %12 {strides = array<i32>} : memref<112x48xf32, #tpu.memory_space<vmem>>, vector<4x48xf32>,
    %14 = vector.extract_strided_slice %5 {offsets = [0, 9], sizes = [4, 48], strides = [1, 1]} : vector<4x72xf32> to vector<4x48xf32>
    %c16 = arith.constant 16 : index
    %c0_8 = arith.constant 0 : index
    %15 = vector.load %arg8[%c16, %c0_8] : memref<112x48xf32, #tpu.memory_space<vmem>>, vector<4x48xf32>
    tpu.vector_store %arg8[%c16, %c0_8], %14 {strides = array<i32>} : memref<112x48xf32, #tpu.memory_space<vmem>>, vector<4x48xf32>,
    %16 = vector.extract_strided_slice %5 {offsets = [0, 10], sizes = [4, 48], strides = [1, 1]} : vector<4x72xf32> to vector<4x48xf32>
    %c20 = arith.constant 20 : index
    %c0_9 = arith.constant 0 : index
    %17 = vector.load %arg8[%c20, %c0_9] : memref<112x48xf32, #tpu.memory_space<vmem>>, vector<4x48xf32>
    tpu.vector_store %arg8[%c20, %c0_9], %16 {strides = array<i32>} : memref<112x48xf32, #tpu.memory_space<vmem>>, vector<4x48xf32>,
    %18 = vector.extract_strided_slice %5 {offsets = [0, 16], sizes = [4, 48], strides = [1, 1]} : vector<4x72xf32> to vector<4x48xf32>
    %c24 = arith.constant 24 : index
    %c0_10 = arith.constant 0 : index
    %19 = vector.load %arg8[%c24, %c0_10] : memref<112x48xf32, #tpu.memory_space<vmem>>, vector<4x48xf32>
    tpu.vector_store %arg8[%c24, %c0_10], %18 {strides = array<i32>} : memref<112x48xf32, #tpu.memory_space<vmem>>, vector<4x48xf32>,
    %20 = vector.extract_strided_slice %5 {offsets = [0, 17], sizes = [4, 48], strides = [1, 1]} : vector<4x72xf32> to vector<4x48xf32>
    %c28 = arith.constant 28 : index
    %c0_11 = arith.constant 0 : index
    %21 = vector.load %arg8[%c28, %c0_11] : memref<112x48xf32, #tpu.memory_space<vmem>>, vector<4x48xf32>
    tpu.vector_store %arg8[%c28, %c0_11], %20 {strides = array<i32>} : memref<112x48xf32, #tpu.memory_space<vmem>>, vector<4x48xf32>,
    %22 = vector.extract_strided_slice %5 {offsets = [0, 18], sizes = [4, 48], strides = [1, 1]} : vector<4x72xf32> to vector<4x48xf32>
    %c32 = arith.constant 32 : index
    %c0_12 = arith.constant 0 : index
    %23 = vector.load %arg8[%c32, %c0_12] : memref<112x48xf32, #tpu.memory_space<vmem>>, vector<4x48xf32>
    tpu.vector_store %arg8[%c32, %c0_12], %22 {strides = array<i32>} : memref<112x48xf32, #tpu.memory_space<vmem>>, vector<4x48xf32>,
    %c1_i32 = arith.constant 1 : i32
    %24 = arith.addi %arg1, %c1_i32 : i32
    %c0_13 = arith.constant 0 : index
    %25 = arith.index_cast %24 : i32 to index
    %c0_14 = arith.constant 0 : index
    %c0_15 = arith.constant 0 : index
    %26 = vector.load %arg2[%c0_13, %25, %c0_14, %c0_15] : memref<1x8x4x72xf32, #tpu.memory_space<vmem>>, vector<1x1x4x72xf32>
    %27 = vector.shape_cast %26 : vector<1x1x4x72xf32> to vector<4x72xf32>
    %28 = vector.extract_strided_slice %27 {offsets = [0, 0], sizes = [4, 48], strides = [1, 1]} : vector<4x72xf32> to vector<4x48xf32>
    %c36 = arith.constant 36 : index
    %c0_16 = arith.constant 0 : index
    %29 = vector.load %arg8[%c36, %c0_16] : memref<112x48xf32, #tpu.memory_space<vmem>>, vector<4x48xf32>
    tpu.vector_store %arg8[%c36, %c0_16], %28 {strides = array<i32>} : memref<112x48xf32, #tpu.memory_space<vmem>>, vector<4x48xf32>,
    %30 = vector.extract_strided_slice %27 {offsets = [0, 1], sizes = [4, 48], strides = [1, 1]} : vector<4x72xf32> to vector<4x48xf32>
    %c40 = arith.constant 40 : index
    %c0_17 = arith.constant 0 : index
    %31 = vector.load %arg8[%c40, %c0_17] : memref<112x48xf32, #tpu.memory_space<vmem>>, vector<4x48xf32>
    tpu.vector_store %arg8[%c40, %c0_17], %30 {strides = array<i32>} : memref<112x48xf32, #tpu.memory_space<vmem>>, vector<4x48xf32>,
    %32 = vector.extract_strided_slice %27 {offsets = [0, 2], sizes = [4, 48], strides = [1, 1]} : vector<4x72xf32> to vector<4x48xf32>
    %c44 = arith.constant 44 : index
    %c0_18 = arith.constant 0 : index
    %33 = vector.load %arg8[%c44, %c0_18] : memref<112x48xf32, #tpu.memory_space<vmem>>, vector<4x48xf32>
    tpu.vector_store %arg8[%c44, %c0_18], %32 {strides = array<i32>} : memref<112x48xf32, #tpu.memory_space<vmem>>, vector<4x48xf32>,
    %34 = vector.extract_strided_slice %27 {offsets = [0, 8], sizes = [4, 48], strides = [1, 1]} : vector<4x72xf32> to vector<4x48xf32>
    %c48 = arith.constant 48 : index
    %c0_19 = arith.constant 0 : index
    %35 = vector.load %arg8[%c48, %c0_19] : memref<112x48xf32, #tpu.memory_space<vmem>>, vector<4x48xf32>
    tpu.vector_store %arg8[%c48, %c0_19], %34 {strides = array<i32>} : memref<112x48xf32, #tpu.memory_space<vmem>>, vector<4x48xf32>,
    %36 = vector.extract_strided_slice %27 {offsets = [0, 9], sizes = [4, 48], strides = [1, 1]} : vector<4x72xf32> to vector<4x48xf32>
    %c52 = arith.constant 52 : index
    %c0_20 = arith.constant 0 : index
    %37 = vector.load %arg8[%c52, %c0_20] : memref<112x48xf32, #tpu.memory_space<vmem>>, vector<4x48xf32>
    tpu.vector_store %arg8[%c52, %c0_20], %36 {strides = array<i32>} : memref<112x48xf32, #tpu.memory_space<vmem>>, vector<4x48xf32>,
    %38 = vector.extract_strided_slice %27 {offsets = [0, 10], sizes = [4, 48], strides = [1, 1]} : vector<4x72xf32> to vector<4x48xf32>
    %c56 = arith.constant 56 : index
    %c0_21 = arith.constant 0 : index
    %39 = vector.load %arg8[%c56, %c0_21] : memref<112x48xf32, #tpu.memory_space<vmem>>, vector<4x48xf32>
    tpu.vector_store %arg8[%c56, %c0_21], %38 {strides = array<i32>} : memref<112x48xf32, #tpu.memory_space<vmem>>, vector<4x48xf32>,
    %40 = vector.extract_strided_slice %27 {offsets = [0, 16], sizes = [4, 48], strides = [1, 1]} : vector<4x72xf32> to vector<4x48xf32>
    %c60 = arith.constant 60 : index
    %c0_22 = arith.constant 0 : index
    %41 = vector.load %arg8[%c60, %c0_22] : memref<112x48xf32, #tpu.memory_space<vmem>>, vector<4x48xf32>
    tpu.vector_store %arg8[%c60, %c0_22], %40 {strides = array<i32>} : memref<112x48xf32, #tpu.memory_space<vmem>>, vector<4x48xf32>,
    %42 = vector.extract_strided_slice %27 {offsets = [0, 17], sizes = [4, 48], strides = [1, 1]} : vector<4x72xf32> to vector<4x48xf32>
    %c64 = arith.constant 64 : index
    %c0_23 = arith.constant 0 : index
    %43 = vector.load %arg8[%c64, %c0_23] : memref<112x48xf32, #tpu.memory_space<vmem>>, vector<4x48xf32>
    tpu.vector_store %arg8[%c64, %c0_23], %42 {strides = array<i32>} : memref<112x48xf32, #tpu.memory_space<vmem>>, vector<4x48xf32>,
    %44 = vector.extract_strided_slice %27 {offsets = [0, 18], sizes = [4, 48], strides = [1, 1]} : vector<4x72xf32> to vector<4x48xf32>
    %c68 = arith.constant 68 : index
    %c0_24 = arith.constant 0 : index
    %45 = vector.load %arg8[%c68, %c0_24] : memref<112x48xf32, #tpu.memory_space<vmem>>, vector<4x48xf32>
    tpu.vector_store %arg8[%c68, %c0_24], %44 {strides = array<i32>} : memref<112x48xf32, #tpu.memory_space<vmem>>, vector<4x48xf32>,
    %c2_i32 = arith.constant 2 : i32
    %46 = arith.addi %arg1, %c2_i32 : i32
    %c0_25 = arith.constant 0 : index
    %47 = arith.index_cast %46 : i32 to index
    %c0_26 = arith.constant 0 : index
    %c0_27 = arith.constant 0 : index
    %48 = vector.load %arg2[%c0_25, %47, %c0_26, %c0_27] : memref<1x8x4x72xf32, #tpu.memory_space<vmem>>, vector<1x1x4x72xf32>
    %49 = vector.shape_cast %48 : vector<1x1x4x72xf32> to vector<4x72xf32>
    %50 = vector.extract_strided_slice %49 {offsets = [0, 0], sizes = [4, 48], strides = [1, 1]} : vector<4x72xf32> to vector<4x48xf32>
    %c72 = arith.constant 72 : index
    %c0_28 = arith.constant 0 : index
    %51 = vector.load %arg8[%c72, %c0_28] : memref<112x48xf32, #tpu.memory_space<vmem>>, vector<4x48xf32>
    tpu.vector_store %arg8[%c72, %c0_28], %50 {strides = array<i32>} : memref<112x48xf32, #tpu.memory_space<vmem>>, vector<4x48xf32>,
    %52 = vector.extract_strided_slice %49 {offsets = [0, 1], sizes = [4, 48], strides = [1, 1]} : vector<4x72xf32> to vector<4x48xf32>
    %c76 = arith.constant 76 : index
    %c0_29 = arith.constant 0 : index
    %53 = vector.load %arg8[%c76, %c0_29] : memref<112x48xf32, #tpu.memory_space<vmem>>, vector<4x48xf32>
    tpu.vector_store %arg8[%c76, %c0_29], %52 {strides = array<i32>} : memref<112x48xf32, #tpu.memory_space<vmem>>, vector<4x48xf32>,
    %54 = vector.extract_strided_slice %49 {offsets = [0, 2], sizes = [4, 48], strides = [1, 1]} : vector<4x72xf32> to vector<4x48xf32>
    %c80 = arith.constant 80 : index
    %c0_30 = arith.constant 0 : index
    %55 = vector.load %arg8[%c80, %c0_30] : memref<112x48xf32, #tpu.memory_space<vmem>>, vector<4x48xf32>
    tpu.vector_store %arg8[%c80, %c0_30], %54 {strides = array<i32>} : memref<112x48xf32, #tpu.memory_space<vmem>>, vector<4x48xf32>,
    %56 = vector.extract_strided_slice %49 {offsets = [0, 8], sizes = [4, 48], strides = [1, 1]} : vector<4x72xf32> to vector<4x48xf32>
    %c84 = arith.constant 84 : index
    %c0_31 = arith.constant 0 : index
    %57 = vector.load %arg8[%c84, %c0_31] : memref<112x48xf32, #tpu.memory_space<vmem>>, vector<4x48xf32>
    tpu.vector_store %arg8[%c84, %c0_31], %56 {strides = array<i32>} : memref<112x48xf32, #tpu.memory_space<vmem>>, vector<4x48xf32>,
    %58 = vector.extract_strided_slice %49 {offsets = [0, 9], sizes = [4, 48], strides = [1, 1]} : vector<4x72xf32> to vector<4x48xf32>
    %c88 = arith.constant 88 : index
    %c0_32 = arith.constant 0 : index
    %59 = vector.load %arg8[%c88, %c0_32] : memref<112x48xf32, #tpu.memory_space<vmem>>, vector<4x48xf32>
    tpu.vector_store %arg8[%c88, %c0_32], %58 {strides = array<i32>} : memref<112x48xf32, #tpu.memory_space<vmem>>, vector<4x48xf32>,
    %60 = vector.extract_strided_slice %49 {offsets = [0, 10], sizes = [4, 48], strides = [1, 1]} : vector<4x72xf32> to vector<4x48xf32>
    %c92 = arith.constant 92 : index
    %c0_33 = arith.constant 0 : index
    %61 = vector.load %arg8[%c92, %c0_33] : memref<112x48xf32, #tpu.memory_space<vmem>>, vector<4x48xf32>
    tpu.vector_store %arg8[%c92, %c0_33], %60 {strides = array<i32>} : memref<112x48xf32, #tpu.memory_space<vmem>>, vector<4x48xf32>,
    %62 = vector.extract_strided_slice %49 {offsets = [0, 16], sizes = [4, 48], strides = [1, 1]} : vector<4x72xf32> to vector<4x48xf32>
    %c96 = arith.constant 96 : index
    %c0_34 = arith.constant 0 : index
    %63 = vector.load %arg8[%c96, %c0_34] : memref<112x48xf32, #tpu.memory_space<vmem>>, vector<4x48xf32>
    tpu.vector_store %arg8[%c96, %c0_34], %62 {strides = array<i32>} : memref<112x48xf32, #tpu.memory_space<vmem>>, vector<4x48xf32>,
    %64 = vector.extract_strided_slice %49 {offsets = [0, 17], sizes = [4, 48], strides = [1, 1]} : vector<4x72xf32> to vector<4x48xf32>
    %c100 = arith.constant 100 : index
    %c0_35 = arith.constant 0 : index
    %65 = vector.load %arg8[%c100, %c0_35] : memref<112x48xf32, #tpu.memory_space<vmem>>, vector<4x48xf32>
    tpu.vector_store %arg8[%c100, %c0_35], %64 {strides = array<i32>} : memref<112x48xf32, #tpu.memory_space<vmem>>, vector<4x48xf32>,
    %66 = vector.extract_strided_slice %49 {offsets = [0, 18], sizes = [4, 48], strides = [1, 1]} : vector<4x72xf32> to vector<4x48xf32>
    %c104 = arith.constant 104 : index
    %c0_36 = arith.constant 0 : index
    %67 = vector.load %arg8[%c104, %c0_36] : memref<112x48xf32, #tpu.memory_space<vmem>>, vector<4x48xf32>
    tpu.vector_store %arg8[%c104, %c0_36], %66 {strides = array<i32>} : memref<112x48xf32, #tpu.memory_space<vmem>>, vector<4x48xf32>,
    %c0_37 = arith.constant 0 : index
    %c0_38 = arith.constant 0 : index
    %68 = vector.load %arg3[%c0_37, %c0_38] : memref<8x112xf32, #tpu.memory_space<vmem>>, vector<8x112xf32>
    %c0_39 = arith.constant 0 : index
    %c0_40 = arith.constant 0 : index
    %69 = vector.load %arg8[%c0_39, %c0_40] : memref<112x48xf32, #tpu.memory_space<vmem>>, vector<112x48xf32>
    %cst_41 = arith.constant dense<0.000000e+00> : vector<8x48xf32>
    %70 = tpu.matmul %68, %69, %cst_41 {dimension_numbers = #tpu.dot_dimension_numbers<[1], [0], [0], [1], [0, 0, 1, 1], [], []>} : vector<8x112xf32>, vector<112x48xf32>, vector<8x48xf32> -> vector<8x48xf32>
    %71 = arith.truncf %70 : vector<8x48xf32> to vector<8x48xbf16>
    %c0_42 = arith.constant 0 : index
    %c0_43 = arith.constant 0 : index
    %c0_44 = arith.constant 0 : index
    %c0_45 = arith.constant 0 : index
    %72 = vector.load %arg5[%c0_42, %c0_43, %c0_44, %c0_45] : memref<1x1x8x48xbf16, #tpu.memory_space<vmem>>, vector<1x1x8x48xbf16>
    %73 = vector.shape_cast %72 : vector<1x1x8x48xbf16> to vector<8x48xbf16>
    %74 = vector.shape_cast %71 : vector<8x48xbf16> to vector<1x1x8x48xbf16>
    tpu.vector_store %arg5[%c0_42, %c0_43, %c0_44, %c0_45], %74 {strides = array<i32>} : memref<1x1x8x48xbf16, #tpu.memory_space<vmem>>, vector<1x1x8x48xbf16>,
    %c0_46 = arith.constant 0 : index
    %c0_47 = arith.constant 0 : index
    %75 = vector.load %arg4[%c0_46, %c0_47] : memref<1x48xf32, #tpu.memory_space<vmem>>, vector<1x48xf32>
    %76 = vector.broadcast %75 : vector<1x48xf32> to vector<8x48xf32>
    %77 = arith.mulf %70, %76 : vector<8x48xf32>
    %cst_48 = arith.constant dense<0.000000e+00> : vector<8xf32>
    %78 = vector.multi_reduction <add>, %77, %cst_48 [1] : vector<8x48xf32> to vector<8xf32>
    %79 = vector.shape_cast %78 : vector<8xf32> to vector<8x1xf32>
    %c0_49 = arith.constant 0 : index
    %c0_50 = arith.constant 0 : index
    %c0_51 = arith.constant 0 : index
    %c0_52 = arith.constant 0 : index
    %80 = vector.load %arg6[%c0_49, %c0_50, %c0_51, %c0_52] : memref<1x1x8x1xf32, #tpu.memory_space<vmem>>, vector<1x1x8x1xf32>
    %81 = vector.shape_cast %80 : vector<1x1x8x1xf32> to vector<8x1xf32>
    %82 = vector.shape_cast %79 : vector<8x1xf32> to vector<1x1x8x1xf32>
    tpu.vector_store %arg6[%c0_49, %c0_50, %c0_51, %c0_52], %82 {strides = array<i32>} : memref<1x1x8x1xf32, #tpu.memory_space<vmem>>, vector<1x1x8x1xf32>,
    %83 = arith.mulf %77, %70 : vector<8x48xf32>
    %cst_53 = arith.constant dense<0.000000e+00> : vector<8xf32>
    %84 = vector.multi_reduction <add>, %83, %cst_53 [1] : vector<8x48xf32> to vector<8xf32>
    %85 = vector.shape_cast %84 : vector<8xf32> to vector<8x1xf32>
    %c0_54 = arith.constant 0 : index
    %c0_55 = arith.constant 0 : index
    %c0_56 = arith.constant 0 : index
    %c0_57 = arith.constant 0 : index
    %86 = vector.load %arg7[%c0_54, %c0_55, %c0_56, %c0_57] : memref<1x1x8x1xf32, #tpu.memory_space<vmem>>, vector<1x1x8x1xf32>
    %87 = vector.shape_cast %86 : vector<1x1x8x1xf32> to vector<8x1xf32>
    %88 = vector.shape_cast %85 : vector<8x1xf32> to vector<1x1x8x1xf32>
    tpu.vector_store %arg7[%c0_54, %c0_55, %c0_56, %c0_57], %88 {strides = array<i32>} : memref<1x1x8x1xf32, #tpu.memory_space<vmem>>, vector<1x1x8x1xf32>,
    return
  }
  func.func @transform_0(%arg0: i32, %arg1: i32) -> (i32, i32, i32, i32) {
    %c0_i32 = arith.constant 0 : i32
    %c0_i32_0 = arith.constant 0 : i32
    %c0_i32_1 = arith.constant 0 : i32
    %c0_i32_2 = arith.constant 0 : i32
    return %arg0, %c0_i32, %c0_i32_0, %c0_i32_1 : i32, i32, i32, i32
  }
  func.func @transform_1(%arg0: i32, %arg1: i32) -> (i32, i32) {
    %c0_i32 = arith.constant 0 : i32
    %c0_i32_0 = arith.constant 0 : i32
    %c0_i32_1 = arith.constant 0 : i32
    return %c0_i32, %c0_i32_0 : i32, i32
  }
  func.func @transform_2(%arg0: i32, %arg1: i32) -> (i32, i32) {
    %c0_i32 = arith.constant 0 : i32
    %c0_i32_0 = arith.constant 0 : i32
    %c0_i32_1 = arith.constant 0 : i32
    return %c0_i32, %c0_i32_0 : i32, i32
  }
  func.func @transform_3(%arg0: i32, %arg1: i32) -> (i32, i32, i32, i32) {
    %c0_i32 = arith.constant 0 : i32
    %c0_i32_0 = arith.constant 0 : i32
    %c0_i32_1 = arith.constant 0 : i32
    return %arg0, %arg1, %c0_i32, %c0_i32_0 : i32, i32, i32, i32
  }
  func.func @transform_4(%arg0: i32, %arg1: i32) -> (i32, i32, i32, i32) {
    %c0_i32 = arith.constant 0 : i32
    %c0_i32_0 = arith.constant 0 : i32
    %c0_i32_1 = arith.constant 0 : i32
    return %arg0, %arg1, %c0_i32, %c0_i32_0 : i32, i32, i32, i32
  }
  func.func @transform_5(%arg0: i32, %arg1: i32) -> (i32, i32, i32, i32) {
    %c0_i32 = arith.constant 0 : i32
    %c0_i32_0 = arith.constant 0 : i32
    %c0_i32_1 = arith.constant 0 : i32
    return %arg0, %arg1, %c0_i32, %c0_i32_0 : i32, i32, i32, i32
  }
}

</mosaic_0001>

<llo_original>
// kernel: tpu_custom_call.1
$region0: #{tpu_custom_call.1}
  #allocation0 [shape = 'u32[]', space=smem, size = 0x4, offset = 0x4, fixed_abs, tag = 'smem constant byte address 0x4 - core index']
  #allocation1 [shape = 'u32[144,128]{1,0:T(1,128)}', space=vmem, size = 0x12000, scoped, tag = 'internal scratch']
  #allocation2 [shape = 'f32[112,48]{1,0:T(8,128)}', space=vmem, size = 0xe000, scoped, tag = 'scratch operand']
  %s0 = inlined_call_operand.hbm [shape: f32[2,8,4,72], index: 0, kind: input, shape index: {}]
  %s1 = inlined_call_operand.hbm [shape: f32[8,112], index: 1, kind: input, shape index: {}]
  %s2 = inlined_call_operand.vmem [shape: f32[1,48], index: 2, kind: input, shape index: {}]
  %s3 = inlined_call_operand.hbm [shape: bf16[2,6,8,48], index: 3, kind: output, shape index: {0}]
  %s4 = inlined_call_operand.vmem [shape: f32[2,6,8,1], index: 4, kind: output, shape index: {1}]
  %s5 = inlined_call_operand.vmem [shape: f32[2,6,8,1], index: 5, kind: output, shape index: {2}]
  %6 = xla_tuple %s3, %s4, %s5
  %s7 = sld [smem:[#allocation0]]
  $region69: #{tpu_custom_call.1} parent=0
    _
  %s9 = ssub.s32 1, %s7
  %s10 = scalar_select 0, %s9, %s7
  $region1: #{tpu_custom_call.1} parent=0
    #allocation3 [shape = 'u8[32768]{0}', space=vmem, size = 0x8000, scoped, tag = 'input window, operand 0']
    #allocation4 [shape = 's32[2]{0}', space=sflag, size = 0x8, scoped, tag = 'scoped memory for tpu_custom_call.1']
    #allocation5 [shape = 's32[2]{0}', space=sflag, size = 0x8, scoped, tag = 'scoped memory for tpu_custom_call.1']
    #allocation6 [shape = 'u8[4096]{0}', space=vmem, size = 0x1000, scoped, tag = 'input window, operand 1, single buffered']
    #allocation7 [shape = 's32[1]{0}', space=sflag, size = 0x4, scoped, tag = 'scoped memory for tpu_custom_call.1']
    #allocation8 [shape = 'u8[4096]{0}', space=vmem, size = 0x1000, scoped, tag = 'output window, operand 0']
    %11 = vsyncpa [#allocation4], 0
    %s12 = scalar_lea.sflag [#allocation4], 1
    %13 = vsyncpa %s12, 0
    %14 = vsyncpa [#allocation7], 0
    %15 = vsyncpa [#allocation5], 0
    %s16 = scalar_lea.sflag [#allocation5], 1
    %17 = vsyncpa %s16, 0
    loop: start=0, step=1, limit=14
    $region2: #{tpu_custom_call.1} parent=1 // loop_pre_header
      _
    $region3: #{tpu_custom_call.1} parent=1 // loop_header
      %s19 = sphi 0, %s23
      %p20 = scmp.ge.s32.totalorder %s19, 14
      %s26 = sphi 0, %s38
      %s27 = sphi 0, %s34
      %s28 = sphi 0, %s26
      %s29 = sphi 0, %s27
      %s30 = sphi 0, %s28
      %s31 = sphi 0, %s29
      %s41 = sphi 0, %s43
      %s44 = sphi 0, %s41
      %s45 = sphi 0, %s44
      %s61 = sphi 0, %s45
      %s65 = sphi 0, %s65
      %s67 = sphi 0, %s65
      %s68 = sphi 0, %s67
      %s82 = sphi 0, %s68
      %s86 = sphi 0, %s86
      %s88 = sphi 0, %s86
      %s89 = sphi 0, %s88
      %s103 = sphi 0, %s89
      %s111 = sphi 0, %s113
      %s114 = sphi 0, %s111
      %s115 = sphi 0, %s114
      %s131 = sphi 0, %s115
      %s139 = sphi 0, %s141
      %s142 = sphi 0, %s139
      %s143 = sphi 0, %s142
      %s159 = sphi 0, %s143
      %s167 = sphi 0, %s169
      %s170 = sphi 0, %s167
      %s171 = sphi 0, %s170
      %s187 = sphi 0, %s171
    $region4: #{tpu_custom_call.1} parent=1 // loop_header_branch
      %22 = sbr.rel (%p20) target = $region8
    $region5: #{tpu_custom_call.1} parent=1 // loop_body
      %s24 = ssub.s32 %s19, 1
      %s25 = ssub.s32 %s19, 2
      %s32 = sadd.s32 1, %s27
      %p33 = scmp.ge.s32.totalorder %s32, 6
      %s34 = scalar_select %p33, 0, %s32
      %s35 = sadd.s32 1, %s26
      %s36 = scalar_select %p33, %s35, %s26
      %p37 = scmp.ge.s32.totalorder %s36, 2
      %s38 = scalar_select %p37, 0, %s36
      %s39 = ssub.s32 %s26, %s38
      %p40 = scmp.eq.s32.totalorder %s39, 0
      %s42 = sadd.s32 %s41, 1
      %s43 = scalar_select %p40, %s41, %s42
      %p46 = pneg %p40
      %p47 = scmp.eq.s32.totalorder %s19, 11
      %p48 = por %p46, %p47
      %p49 = scmp.ne.s32.totalorder %s41, %s44
      %p50 = scmp.eq.s32.totalorder %s19, 0
      %p51 = por %p49, %p50
      %p52 = scmp.ne.s32.totalorder %s41, %s44
      %p53 = scmp.eq.s32.totalorder %s24, 11
      %p54 = por %p52, %p53
      %p55 = scmp.ne.s32.totalorder %s44, %s45
      %p56 = scmp.eq.s32.totalorder %s24, 0
      %p57 = por %p55, %p56
      %p58 = scmp.ne.s32.totalorder %s44, %s45
      %p59 = scmp.eq.s32.totalorder %s25, 11
      %p60 = por %p58, %p59
      %p62 = scmp.ne.s32.totalorder %s45, %s61
      %p63 = scmp.eq.s32.totalorder %s25, 0
      %p64 = por %p62, %p63
      %s66 = sadd.s32 %s65, 1
      %p69 = scmp.eq.s32.totalorder %s19, 11
      %p70 = scmp.ne.s32.totalorder %s65, %s67
      %p71 = scmp.eq.s32.totalorder %s19, 0
      %p72 = por %p70, %p71
      %p73 = scmp.ne.s32.totalorder %s65, %s67
      %p74 = scmp.eq.s32.totalorder %s24, 11
      %p75 = por %p73, %p74
      %p76 = scmp.ne.s32.totalorder %s67, %s68
      %p77 = scmp.eq.s32.totalorder %s24, 0
      %p78 = por %p76, %p77
      %p79 = scmp.ne.s32.totalorder %s67, %s68
      %p80 = scmp.eq.s32.totalorder %s25, 11
      %p81 = por %p79, %p80
      %p83 = scmp.ne.s32.totalorder %s68, %s82
      %p84 = scmp.eq.s32.totalorder %s25, 0
      %p85 = por %p83, %p84
      %s87 = sadd.s32 %s86, 1
      %p90 = scmp.eq.s32.totalorder %s19, 11
      %p91 = scmp.ne.s32.totalorder %s86, %s88
      %p92 = scmp.eq.s32.totalorder %s19, 0
      %p93 = por %p91, %p92
      %p94 = scmp.ne.s32.totalorder %s86, %s88
      %p95 = scmp.eq.s32.totalorder %s24, 11
      %p96 = por %p94, %p95
      %p97 = scmp.ne.s32.totalorder %s88, %s89
      %p98 = scmp.eq.s32.totalorder %s24, 0
      %p99 = por %p97, %p98
      %p100 = scmp.ne.s32.totalorder %s88, %s89
      %p101 = scmp.eq.s32.totalorder %s25, 11
      %p102 = por %p100, %p101
      %p104 = scmp.ne.s32.totalorder %s89, %s103
      %p105 = scmp.eq.s32.totalorder %s25, 0
      %p106 = por %p104, %p105
      %s107 = ssub.s32 %s26, %s38
      %s108 = ssub.s32 %s27, %s34
      %s109 = sor.u32 %s107, %s108
      %p110 = scmp.eq.s32.totalorder %s109, 0
      %s112 = sadd.s32 %s111, 1
      %s113 = scalar_select %p110, %s111, %s112
      %p116 = pneg %p110
      %p117 = scmp.eq.s32.totalorder %s19, 11
      %p118 = por %p116, %p117
      %p119 = scmp.ne.s32.totalorder %s111, %s114
      %p120 = scmp.eq.s32.totalorder %s19, 0
      %p121 = por %p119, %p120
      %p122 = scmp.ne.s32.totalorder %s111, %s114
      %p123 = scmp.eq.s32.totalorder %s24, 11
      %p124 = por %p122, %p123
      %p125 = scmp.ne.s32.totalorder %s114, %s115
      %p126 = scmp.eq.s32.totalorder %s24, 0
      %p127 = por %p125, %p126
      %p128 = scmp.ne.s32.totalorder %s114, %s115
      %p129 = scmp.eq.s32.totalorder %s25, 11
      %p130 = por %p128, %p129
      %p132 = scmp.ne.s32.totalorder %s115, %s131
      %p133 = scmp.eq.s32.totalorder %s25, 0
      %p134 = por %p132, %p133
      %s135 = ssub.s32 %s26, %s38
      %s136 = ssub.s32 %s27, %s34
      %s137 = sor.u32 %s135, %s136
      %p138 = scmp.eq.s32.totalorder %s137, 0
      %s140 = sadd.s32 %s139, 1
      %s141 = scalar_select %p138, %s139, %s140
      %p144 = pneg %p138
      %p145 = scmp.eq.s32.totalorder %s19, 11
      %p146 = por %p144, %p145
      %p147 = scmp.ne.s32.totalorder %s139, %s142
      %p148 = scmp.eq.s32.totalorder %s19, 0
      %p149 = por %p147, %p148
      %p150 = scmp.ne.s32.totalorder %s139, %s142
      %p151 = scmp.eq.s32.totalorder %s24, 11
      %p152 = por %p150, %p151
      %p153 = scmp.ne.s32.totalorder %s142, %s143
      %p154 = scmp.eq.s32.totalorder %s24, 0
      %p155 = por %p153, %p154
      %p156 = scmp.ne.s32.totalorder %s142, %s143
      %p157 = scmp.eq.s32.totalorder %s25, 11
      %p158 = por %p156, %p157
      %p160 = scmp.ne.s32.totalorder %s143, %s159
      %p161 = scmp.eq.s32.totalorder %s25, 0
      %p162 = por %p160, %p161
      %s163 = ssub.s32 %s26, %s38
      %s164 = ssub.s32 %s27, %s34
      %s165 = sor.u32 %s163, %s164
      %p166 = scmp.eq.s32.totalorder %s165, 0
      %s168 = sadd.s32 %s167, 1
      %s169 = scalar_select %p166, %s167, %s168
      %p172 = pneg %p166
      %p173 = scmp.eq.s32.totalorder %s19, 11
      %p174 = por %p172, %p173
      %p175 = scmp.ne.s32.totalorder %s167, %s170
      %p176 = scmp.eq.s32.totalorder %s19, 0
      %p177 = por %p175, %p176
      %p178 = scmp.ne.s32.totalorder %s167, %s170
      %p179 = scmp.eq.s32.totalorder %s24, 11
      %p180 = por %p178, %p179
      %p181 = scmp.ne.s32.totalorder %s170, %s171
      %p182 = scmp.eq.s32.totalorder %s24, 0
      %p183 = por %p181, %p182
      %p184 = scmp.ne.s32.totalorder %s170, %s171
      %p185 = scmp.eq.s32.totalorder %s25, 11
      %p186 = por %p184, %p185
      %p188 = scmp.ne.s32.totalorder %s171, %s187
      %p189 = scmp.eq.s32.totalorder %s25, 0
      %p190 = por %p188, %p189
      %p191 = scmp.le.s32.totalorder 1, %s19
      %p192 = scmp.lt.s32.totalorder %s19, 13
      %p193 = pnand %p191, %p192
      %p194 = pneg %p193
      // Predicated region
      $region9: #{tpu_custom_call.1} parent=5 // pred_check
        _
      $region10: #{tpu_custom_call.1} parent=5 // pred_check_branch
        %196 = sbr.rel (%p193) target = $region12
      $region11: #{tpu_custom_call.1} parent=5 // pred_region
        %s197 = ssub.s32 %s19, 1
        // Predicated region
        $region13: #{tpu_custom_call.1} parent=11 // pred_check
          %p198 = pneg %p78
        $region14: #{tpu_custom_call.1} parent=11 // pred_check_branch
          %200 = sbr.rel (%p198) target = $region16
        $region15: #{tpu_custom_call.1} parent=11 // pred_region
          %s202 = ssub.s32 128, 128
          %203 = vsyncadd [#allocation7], %s202
          %s205 = sshll.u32 [#allocation6], 4
          %s206 = int_to_ptr.vmem [resolvable:$true] %s205
          %208 = dma.hbm_to_vmem [thread:$0]  %s1, 128, %s206, [#allocation7]
        $region16: #{tpu_custom_call.1} parent=11 // pred_fallthru
          _
        // Predicated region
        $region17: #{tpu_custom_call.1} parent=11 // pred_check
          %p209 = pneg %p99
        $region18: #{tpu_custom_call.1} parent=11 // pred_check_branch
          %211 = sbr.rel (%p209) target = $region20
        $region19: #{tpu_custom_call.1} parent=11 // pred_region
          _
        $region20: #{tpu_custom_call.1} parent=11 // pred_fallthru
          _
      $region12: #{tpu_custom_call.1} parent=5 // pred_fallthru
        _
      %p212 = scmp.lt.s32.totalorder %s19, 12
      // Predicated region
      $region21: #{tpu_custom_call.1} parent=5 // pred_check
        %p213 = pneg %p212
      $region22: #{tpu_custom_call.1} parent=5 // pred_check_branch
        %215 = sbr.rel (%p213) target = $region24
      $region23: #{tpu_custom_call.1} parent=5 // pred_region
        // Predicated region
        $region25: #{tpu_custom_call.1} parent=23 // pred_check
          %p216 = pneg %p51
        $region26: #{tpu_custom_call.1} parent=23 // pred_check_branch
          %218 = sbr.rel (%p216) target = $region28
        $region27: #{tpu_custom_call.1} parent=23 // pred_region
          %s219 = sand.u32 %s41, 1
          %s220 = scalar_lea.sflag [#allocation4], %s219
          %s221 = sand.u32 %s41, 1
          %s222 = smul.addr %s221, 32
          %s223 = scalar_lea.vmem [#allocation3], %s222
          %s225 = ssub.s32 512, 512
          %226 = vsyncadd %s220, %s225
          %s227 = smul.addr %s26, 8
          %s228 = smul.addr %s227, 64
          %s229 = scalar_lea.hbm %s0, %s228
          %s230 = sshll.u32 %s223, 4
          %s231 = int_to_ptr.vmem [resolvable:$true] %s230
          %236 = dma.hbm_to_vmem [thread:$0]  %s229, 512, %s231, %s220, 64, 64, 4
        $region28: #{tpu_custom_call.1} parent=23 // pred_fallthru
          _
      $region24: #{tpu_custom_call.1} parent=5 // pred_fallthru
        _
      %p237 = scmp.le.s32.totalorder 1, %s19
      %p238 = scmp.lt.s32.totalorder %s19, 13
      %p239 = pnand %p237, %p238
      %p240 = pneg %p239
      // Predicated region
      $region29: #{tpu_custom_call.1} parent=5 // pred_check
        _
      $region30: #{tpu_custom_call.1} parent=5 // pred_check_branch
        %242 = sbr.rel (%p239) target = $region32
      $region31: #{tpu_custom_call.1} parent=5 // pred_region
        %s243 = ssub.s32 %s19, 1
        %s244 = sand.u32 %s44, 1
        %s245 = scalar_lea.sflag [#allocation4], %s244
        %s246 = sand.u32 %s44, 1
        %s247 = smul.addr %s246, 32
        %s248 = scalar_lea.vmem [#allocation3], %s247
        // Predicated region
        $region33: #{tpu_custom_call.1} parent=31 // pred_check
          %p249 = pneg %p57
        $region34: #{tpu_custom_call.1} parent=31 // pred_check_branch
          %251 = sbr.rel (%p249) target = $region36
        $region35: #{tpu_custom_call.1} parent=31 // pred_region
          %252 = dma.done %s245, 512
        $region36: #{tpu_custom_call.1} parent=31 // pred_fallthru
          _
        // Predicated region
        $region37: #{tpu_custom_call.1} parent=31 // pred_check
          %p253 = pneg %p78
        $region38: #{tpu_custom_call.1} parent=31 // pred_check_branch
          %255 = sbr.rel (%p253) target = $region40
        $region39: #{tpu_custom_call.1} parent=31 // pred_region
          %256 = dma.done [#allocation7], 128
        $region40: #{tpu_custom_call.1} parent=31 // pred_fallthru
          _
        %s257 = sand.u32 %s44, 1
        %s258 = scalar_lea.sflag [#allocation4], %s257
        %s259 = sand.u32 %s44, 1
        %s260 = smul.addr %s259, 32
        %s261 = scalar_lea.vmem [#allocation3], %s260
        %p262 = pneg %p57
        %p263 = pneg %p54
        %p264 = pneg %p78
        %p265 = pneg %p75
        %p266 = pneg %p99
        %p267 = pneg %p96
        %p268 = pneg %p127
        %p269 = pneg %p124
        %s270 = sand.u32 %s114, 1
        %s271 = scalar_lea.sflag [#allocation5], %s270
        %s272 = sand.u32 %s114, 1
        %s273 = smul.addr %s272, 4
        %s274 = scalar_lea.vmem [#allocation8], %s273
        %p275 = pneg %p155
        %p276 = pneg %p152
        %p277 = scmp.lt.s32.totalorder %s28, 1
        %s278 = scalar_select %p277, %s28, 1
        %p279 = scmp.lt.s32.totalorder %s29, 5
        %s280 = scalar_select %p279, %s29, 5
        %s281 = smul.addr %s278, 6
        %s282 = sadd.s32 %s280, %s281
        %s283 = smul.addr %s282, 8
        %s284 = scalar_lea.vmem %s4, %s283
        %p285 = pneg %p183
        %p286 = pneg %p180
        %p287 = scmp.lt.s32.totalorder %s28, 1
        %s288 = scalar_select %p287, %s28, 1
        %p289 = scmp.lt.s32.totalorder %s29, 5
        %s290 = scalar_select %p289, %s29, 5
        %s291 = smul.addr %s288, 6
        %s292 = sadd.s32 %s290, %s291
        %s293 = smul.addr %s292, 8
        %s294 = scalar_lea.vmem %s5, %s293
        %p295 = scmp.lt.s32.totalorder %s28, 1
        %s296 = scalar_select %p295, %s28, 1
        %p297 = scmp.lt.s32.totalorder %s29, 5
        %s298 = scalar_select %p297, %s29, 5
        %s299 = smul.addr %s296, 6
        %s300 = sadd.s32 %s298, %s299
        %s301 = smul.addr %s300, 8
        %s302 = scalar_lea.vmem %s4, %s301
        %p303 = scmp.lt.s32.totalorder %s28, 1
        %s304 = scalar_select %p303, %s28, 1
        %p305 = scmp.lt.s32.totalorder %s29, 5
        %s306 = scalar_select %p305, %s29, 5
        %s307 = smul.addr %s304, 6
        %s308 = sadd.s32 %s306, %s307
        %s309 = smul.addr %s308, 8
        %s310 = scalar_lea.vmem %s5, %s309
        %vm311 = vcmask 388096
        %312 = vst.msk [vmem:[#allocation2 + $0x6c] sm:$0xf] %vm311, 0.0
        %s313 = smul.u32 %s29, 4
        %s314 = scalar_lea.vmem %s248, %s313 [#allocation3]
        %v315 = vld [vmem:[%s314] sm:$0xf]
        %316 = vst.msk [vmem:[#allocation2] sm:$0xf] %vm311, %v315
        %318 = vrot.lane.b32.xlu0 %v315, 127
        %v319 = vpop.permute.xlu0 %318
        %321 = vst.msk [vmem:[#allocation2 + $0x4] sm:$0xf] %vm311, %v319
        %322 = vrot.lane.b32.xlu0 %v315, 126
        %v323 = vpop.permute.xlu0 %322
        %325 = vst.msk [vmem:[#allocation2 + $0x8] sm:$0xf] %vm311, %v323
        %326 = vrot.lane.b32.xlu0 %v315, 120
        %v327 = vpop.permute.xlu0 %326
        %329 = vst.msk [vmem:[#allocation2 + $0xc] sm:$0xf] %vm311, %v327
        %330 = vrot.lane.b32.xlu0 %v315, 119
        %v331 = vpop.permute.xlu0 %330
        %333 = vst.msk [vmem:[#allocation2 + $0x10] sm:$0xf] %vm311, %v331
        %334 = vrot.lane.b32.xlu0 %v315, 118
        %v335 = vpop.permute.xlu0 %334
        %337 = vst.msk [vmem:[#allocation2 + $0x14] sm:$0xf] %vm311, %v335
        %338 = vrot.lane.b32.xlu0 %v315, 112
        %v339 = vpop.permute.xlu0 %338
        %341 = vst.msk [vmem:[#allocation2 + $0x18] sm:$0xf] %vm311, %v339
        %342 = vrot.lane.b32.xlu0 %v315, 111
        %v343 = vpop.permute.xlu0 %342
        %345 = vst.msk [vmem:[#allocation2 + $0x1c] sm:$0xf] %vm311, %v343
        %346 = vrot.lane.b32.xlu0 %v315, 110
        %v347 = vpop.permute.xlu0 %346
        %349 = vst.msk [vmem:[#allocation2 + $0x20] sm:$0xf] %vm311, %v347
        %s350 = sadd.s32 %s29, 1
        %s351 = smul.u32 %s350, 4
        %s352 = scalar_lea.vmem %s248, %s351 [#allocation3]
        %v353 = vld [vmem:[%s352] sm:$0xf]
        %354 = vst.msk [vmem:[#allocation2 + $0x24] sm:$0xf] %vm311, %v353
        %356 = vrot.lane.b32.xlu0 %v353, 127
        %v357 = vpop.permute.xlu0 %356
        %359 = vst.msk [vmem:[#allocation2 + $0x28] sm:$0xf] %vm311, %v357
        %360 = vrot.lane.b32.xlu0 %v353, 126
        %v361 = vpop.permute.xlu0 %360
        %363 = vst.msk [vmem:[#allocation2 + $0x2c] sm:$0xf] %vm311, %v361
        %364 = vrot.lane.b32.xlu0 %v353, 120
        %v365 = vpop.permute.xlu0 %364
        %367 = vst.msk [vmem:[#allocation2 + $0x30] sm:$0xf] %vm311, %v365
        %368 = vrot.lane.b32.xlu0 %v353, 119
        %v369 = vpop.permute.xlu0 %368
        %371 = vst.msk [vmem:[#allocation2 + $0x34] sm:$0xf] %vm311, %v369
        %372 = vrot.lane.b32.xlu0 %v353, 118
        %v373 = vpop.permute.xlu0 %372
        %375 = vst.msk [vmem:[#allocation2 + $0x38] sm:$0xf] %vm311, %v373
        %376 = vrot.lane.b32.xlu0 %v353, 112
        %v377 = vpop.permute.xlu0 %376
        %379 = vst.msk [vmem:[#allocation2 + $0x3c] sm:$0xf] %vm311, %v377
        %380 = vrot.lane.b32.xlu0 %v353, 111
        %v381 = vpop.permute.xlu0 %380
        %383 = vst.msk [vmem:[#allocation2 + $0x40] sm:$0xf] %vm311, %v381
        %384 = vrot.lane.b32.xlu0 %v353, 110
        %v385 = vpop.permute.xlu0 %384
        %387 = vst.msk [vmem:[#allocation2 + $0x44] sm:$0xf] %vm311, %v385
        %s388 = sadd.s32 %s29, 2
        %s389 = smul.u32 %s388, 4
        %s390 = scalar_lea.vmem %s248, %s389 [#allocation3]
        %v391 = vld [vmem:[%s390] sm:$0xf]
        %392 = vst.msk [vmem:[#allocation2 + $0x48] sm:$0xf] %vm311, %v391
        %394 = vrot.lane.b32.xlu0 %v391, 127
        %v395 = vpop.permute.xlu0 %394
        %397 = vst.msk [vmem:[#allocation2 + $0x4c] sm:$0xf] %vm311, %v395
        %398 = vrot.lane.b32.xlu0 %v391, 126
        %v399 = vpop.permute.xlu0 %398
        %401 = vst.msk [vmem:[#allocation2 + $0x50] sm:$0xf] %vm311, %v399
        %402 = vrot.lane.b32.xlu0 %v391, 120
        %v403 = vpop.permute.xlu0 %402
        %405 = vst.msk [vmem:[#allocation2 + $0x54] sm:$0xf] %vm311, %v403
        %406 = vrot.lane.b32.xlu0 %v391, 119
        %v407 = vpop.permute.xlu0 %406
        %409 = vst.msk [vmem:[#allocation2 + $0x58] sm:$0xf] %vm311, %v407
        %410 = vrot.lane.b32.xlu0 %v391, 118
        %v411 = vpop.permute.xlu0 %410
        %413 = vst.msk [vmem:[#allocation2 + $0x5c] sm:$0xf] %vm311, %v411
        %414 = vrot.lane.b32.xlu0 %v391, 112
        %v415 = vpop.permute.xlu0 %414
        %417 = vst.msk [vmem:[#allocation2 + $0x60] sm:$0xf] %vm311, %v415
        %418 = vrot.lane.b32.xlu0 %v391, 111
        %v419 = vpop.permute.xlu0 %418
        %421 = vst.msk [vmem:[#allocation2 + $0x64] sm:$0xf] %vm311, %v419
        %422 = vrot.lane.b32.xlu0 %v391, 110
        %v423 = vpop.permute.xlu0 %422
        %425 = vst.msk [vmem:[#allocation2 + $0x68] sm:$0xf] %vm311, %v423
        %v426 = vld [vmem:[#allocation6] sm:$0xff]
        %v427 = vld [vmem:[#allocation2] sm:$0xff]
        %v428 = vld [vmem:[#allocation2 + $0x8] sm:$0xff]
        %v429 = vld [vmem:[#allocation2 + $0x10] sm:$0xff]
        %v430 = vld [vmem:[#allocation2 + $0x18] sm:$0xff]
        %v431 = vld [vmem:[#allocation2 + $0x20] sm:$0xff]
        %v432 = vld [vmem:[#allocation2 + $0x28] sm:$0xff]
        %v433 = vld [vmem:[#allocation2 + $0x30] sm:$0xff]
        %v434 = vld [vmem:[#allocation2 + $0x38] sm:$0xff]
        %v435 = vld [vmem:[#allocation2 + $0x40] sm:$0xff]
        %v436 = vld [vmem:[#allocation2 + $0x48] sm:$0xff]
        %v437 = vld [vmem:[#allocation2 + $0x50] sm:$0xff]
        %v438 = vld [vmem:[#allocation2 + $0x58] sm:$0xff]
        %v439 = vld [vmem:[#allocation2 + $0x60] sm:$0xff]
        %v440 = vld [vmem:[#allocation2 + $0x68] sm:$0xff]
        %vm441 = vcmask 916480
        %v443 = vsel %vm441, %v426, 0
        %445 = vmatprep.subr.mxu0 0.0
        %446 = vmatpush1.msra.mxu0 %v427
        %447 = vmatprep.subr.mxu0 0.0
        %448 = vmatpush1.msra.mxu0 %v428
        %449 = vmatprep.subr.mxu0 0.0
        %450 = vmatpush1.msra.mxu0 %v429
        %451 = vmatprep.subr.mxu0 0.0
        %452 = vmatpush1.msra.mxu0 %v430
        %453 = vmatprep.subr.mxu0 0.0
        %454 = vmatpush1.msra.mxu0 %v431
        %455 = vmatprep.subr.mxu0 0.0
        %456 = vmatpush1.msra.mxu0 %v432
        %457 = vmatprep.subr.mxu0 0.0
        %458 = vmatpush1.msra.mxu0 %v433
        %459 = vmatprep.subr.mxu0 0.0
        %460 = vmatpush1.msra.mxu0 %v434
        %461 = vmatprep.subr.mxu0 0.0
        %462 = vmatpush1.msra.mxu0 %v435
        %463 = vmatprep.subr.mxu0 0.0
        %464 = vmatpush1.msra.mxu0 %v436
        %465 = vmatprep.subr.mxu0 0.0
        %466 = vmatpush1.msra.mxu0 %v437
        %467 = vmatprep.subr.mxu0 0.0
        %468 = vmatpush1.msra.mxu0 %v438
        %469 = vmatprep.subr.mxu0 0.0
        %470 = vmatpush1.msra.mxu0 %v439
        %471 = vmatprep.subr.mxu0 0.0
        %472 = vmatpush1.msra.mxu0 %v440
        %473 = vmatprep.subr.mxu0 0.0
        %474 = vmatpush1.msra.mxu0 0.0
        %475 = vmatprep.subr.mxu0 0.0
        %476 = vmatpush1.msra.mxu0 0.0
        %477 = vmatprep.subr.mxu0 0.0
        %478 = vmatpush1.msra.mxu0 0.0
        %479 = vmatprep.subr.mxu0 0.0
        %480 = vmatpush1.msra.mxu0 0.0
        %481 = vmatprep.subr.mxu0 0.0
        %482 = vmatpush1.msra.mxu0 0.0
        %483 = vmatprep.subr.mxu0 0.0
        %484 = vmatpush1.msra.mxu0 0.0
        %485 = vmatprep.subr.mxu0 0.0
        %486 = vmatpush1.msra.mxu0 0.0
        %487 = vmatprep.subr.mxu0 0.0
        %488 = vmatpush1.msra.mxu0 0.0
        %489 = vmatprep.subr.mxu0 0.0
        %490 = vmatpush1.msra.mxu0 0.0
        %491 = vmatprep.subr.mxu0 0.0
        %492 = vmatpush1.msra.mxu0 0.0
        %493 = vmatprep.subr.mxu0 0.0
        %494 = vmatpush1.msra.mxu0 0.0
        %495 = vmatprep.subr.mxu0 0.0
        %496 = vmatpush1.msra.mxu0 0.0
        %497 = vmatprep.subr.mxu0 0.0
        %498 = vmatpush1.msra.mxu0 0.0
        %499 = vmatprep.subr.mxu0 0.0
        %500 = vmatpush1.msra.mxu0 0.0
        %501 = vmatprep.subr.mxu0 0.0
        %502 = vmatpush1.msra.mxu0 0.0
        %503 = vmatprep.subr.mxu0 0.0
        %504 = vmatpush1.msra.mxu0 0.0
        %505 = vmatprep.subr.mxu0 0.0
        %506 = vmatpush1.msra.mxu0 0.0
        %507 = vmatprep.subr.mxu0 0.0
        %508 = vmatpush1.msra.mxu0 0.0
        %509 = vmatprep.mubr.f32.mxu0 0.0
        %510 = vmatmul.mubr.f32.gmra.mrb[0].mxu0 %v443
        %v511 = vpop.f32.mrb[0].mxu0
        %v512 = vadd.f32 0.0, %v511
        %v513 = vpop.f32.mrb[0].mxu0
        %514 = vdwg.mxu0
        %v515 = vpack.c.bf16 %v512, %v512
        %516 = vst.msk [vmem:[%s274] sm:$0xf] %vm311, %v515
        %v517 = vld [vmem:[%s2] sm:$0x1]
        %v519 = vlaneseq
        %v520 = vshrl.u32 %v519, 7
        %v521 = vsub.s32 0, %v520
        %v522 = vrot.slane %v517, %v521
        %v524 = vmul.f32 %v512, %v522
        %vm525 = vcmask 392192
        %v526 = vsel %vm525, %v524, 0.0
        %527 = vadd.xlane.f32.xlu0 %v526
        %v528 = vpop.xlane.xlu0 %527
        %vm529 = vcmask 7168
        %530 = vst.msk [vmem:[%s302] sm:$0xff] %vm529, %v528
        %v531 = vmul.f32 %v524, %v512
        %v532 = vsel %vm525, %v531, 0.0
        %533 = vadd.xlane.f32.xlu0 %v532
        %v534 = vpop.xlane.xlu0 %533
        %535 = vst.msk [vmem:[%s310] sm:$0xff] %vm529, %v534
        %s536 = sand.u32 %s114, 1
        %s537 = scalar_lea.sflag [#allocation5], %s536
        %s538 = sand.u32 %s114, 1
        %s539 = smul.addr %s538, 4
        %s540 = scalar_lea.vmem [#allocation8], %s539
        %p541 = scmp.lt.s32.totalorder %s28, 1
        %s542 = scalar_select %p541, %s28, 1
        %p543 = scmp.lt.s32.totalorder %s29, 5
        %s544 = scalar_select %p543, %s29, 5
        %s545 = smul.addr %s542, 6
        %s546 = sadd.s32 %s544, %s545
        %s547 = smul.addr %s546, 8
        %s548 = scalar_lea.vmem %s4, %s547
        %p549 = scmp.lt.s32.totalorder %s28, 1
        %s550 = scalar_select %p549, %s28, 1
        %p551 = scmp.lt.s32.totalorder %s29, 5
        %s552 = scalar_select %p551, %s29, 5
        %s553 = smul.addr %s550, 6
        %s554 = sadd.s32 %s552, %s553
        %s555 = smul.addr %s554, 8
        %s556 = scalar_lea.vmem %s5, %s555
        // Predicated region
        $region41: #{tpu_custom_call.1} parent=31 // pred_check
          %p557 = pneg %p124
        $region42: #{tpu_custom_call.1} parent=31 // pred_check_branch
          %559 = sbr.rel (%p557) target = $region44
        $region43: #{tpu_custom_call.1} parent=31 // pred_region
          %s561 = ssub.s32 64, 64
          %562 = vsyncadd %s537, %s561
          %s563 = smul.addr %s28, 6
          %s564 = sadd.s32 %s29, %s563
          %s565 = smul.addr %s564, 64
          %s566 = scalar_lea.hbm %s3, %s565
          %s568 = sshll.u32 %s540, 4
          %s569 = int_to_ptr.vmem [resolvable:$true] %s568
          %571 = dma.vmem_to_hbm [thread:$0]  %s569, 64, %s566, %s537
        $region44: #{tpu_custom_call.1} parent=31 // pred_fallthru
          _
        // Predicated region
        $region45: #{tpu_custom_call.1} parent=31 // pred_check
          %p572 = pneg %p152
        $region46: #{tpu_custom_call.1} parent=31 // pred_check_branch
          %574 = sbr.rel (%p572) target = $region48
        $region47: #{tpu_custom_call.1} parent=31 // pred_region
          _
        $region48: #{tpu_custom_call.1} parent=31 // pred_fallthru
          _
        // Predicated region
        $region49: #{tpu_custom_call.1} parent=31 // pred_check
          %p575 = pneg %p180
        $region50: #{tpu_custom_call.1} parent=31 // pred_check_branch
          %577 = sbr.rel (%p575) target = $region52
        $region51: #{tpu_custom_call.1} parent=31 // pred_region
          _
        $region52: #{tpu_custom_call.1} parent=31 // pred_fallthru
          _
      $region32: #{tpu_custom_call.1} parent=5 // pred_fallthru
        _
      %p578 = scmp.le.s32.totalorder 2, %s19
      // Predicated region
      $region53: #{tpu_custom_call.1} parent=5 // pred_check
        %p579 = pneg %p578
      $region54: #{tpu_custom_call.1} parent=5 // pred_check_branch
        %581 = sbr.rel (%p579) target = $region56
      $region55: #{tpu_custom_call.1} parent=5 // pred_region
        %s582 = ssub.s32 %s19, 2
        // Predicated region
        $region57: #{tpu_custom_call.1} parent=55 // pred_check
          %p583 = pneg %p130
        $region58: #{tpu_custom_call.1} parent=55 // pred_check_branch
          %585 = sbr.rel (%p583) target = $region60
        $region59: #{tpu_custom_call.1} parent=55 // pred_region
          %s586 = sand.u32 %s115, 1
          %s587 = scalar_lea.sflag [#allocation5], %s586
          %s588 = sand.u32 %s115, 1
          %s589 = smul.addr %s588, 4
          %s590 = scalar_lea.vmem [#allocation8], %s589
          %591 = dma.done %s587, 64
        $region60: #{tpu_custom_call.1} parent=55 // pred_fallthru
          _
        // Predicated region
        $region61: #{tpu_custom_call.1} parent=55 // pred_check
          %p592 = pneg %p158
        $region62: #{tpu_custom_call.1} parent=55 // pred_check_branch
          %594 = sbr.rel (%p592) target = $region64
        $region63: #{tpu_custom_call.1} parent=55 // pred_region
          %p595 = scmp.lt.s32.totalorder %s30, 1
          %s596 = scalar_select %p595, %s30, 1
          %p597 = scmp.lt.s32.totalorder %s31, 5
          %s598 = scalar_select %p597, %s31, 5
          %s599 = smul.addr %s596, 6
          %s600 = sadd.s32 %s598, %s599
          %s601 = smul.addr %s600, 8
          %s602 = scalar_lea.vmem %s4, %s601
        $region64: #{tpu_custom_call.1} parent=55 // pred_fallthru
          _
        // Predicated region
        $region65: #{tpu_custom_call.1} parent=55 // pred_check
          %p603 = pneg %p186
        $region66: #{tpu_custom_call.1} parent=55 // pred_check_branch
          %605 = sbr.rel (%p603) target = $region68
        $region67: #{tpu_custom_call.1} parent=55 // pred_region
          %p606 = scmp.lt.s32.totalorder %s30, 1
          %s607 = scalar_select %p606, %s30, 1
          %p608 = scmp.lt.s32.totalorder %s31, 5
          %s609 = scalar_select %p608, %s31, 5
          %s610 = smul.addr %s607, 6
          %s611 = sadd.s32 %s609, %s610
          %s612 = smul.addr %s611, 8
          %s613 = scalar_lea.vmem %s5, %s612
        $region68: #{tpu_custom_call.1} parent=55 // pred_fallthru
          _
      $region56: #{tpu_custom_call.1} parent=5 // pred_fallthru
        _
    $region6: #{tpu_custom_call.1} parent=1 // loop_footer
      %s23 = sadd.s32 1, %s19
    $region7: #{tpu_custom_call.1} parent=1 // loop_footer_branch
      %18 = sbr.rel target = $region3
    $region8: #{tpu_custom_call.1} parent=1 // loop_exit
      _
    %614 = vsyncpa [#allocation4], 1
    %s615 = scalar_lea.sflag [#allocation4], 1
    %616 = vsyncpa %s615, 1
    %617 = vsyncpa [#allocation7], 1
    %618 = vsyncpa [#allocation5], 1
    %s619 = scalar_lea.sflag [#allocation5], 1
    %620 = vsyncpa %s619, 1

</llo_original>
